<compile_context>
chip_gen: v6e
topology: v6e:2x2x1
jax: 0.10.0
libtpu: 0.0.40
codegen_flags: <defaults>
</compile_context>

<pallas_src>
import functools

import jax
import jax.numpy as jnp
from jax.experimental import pallas as pl
from jax.experimental.pallas import tpu as pltpu


# -----------------------------------------------------------------------------
# Kernel 1: AdaptiveConcatPool2d ([max, avg] over spatial), item-tiled.
# -----------------------------------------------------------------------------
def _concat_pool_kernel(f_ref, out_ref, *, inv_s):
    x = f_ref[...].astype(jnp.float32)            # (TB, S, nc); f32 math (v5e-safe)
    nc = x.shape[-1]
    out_ref[:, :nc] = jnp.max(x, axis=1)          # [max || avg] along lanes
    out_ref[:, nc:] = jnp.sum(x, axis=1) * inv_s


def _pick_item_tile(B, item_bytes, target_bytes=2 << 20):
    """Items per block: prefer the largest multiple-of-8 divisor of B with <= ~2 MiB DMAs
    (sublane-dense output writes); else the smallest such divisor; else all B items."""
    divisors = [d for d in range(8, B + 1, 8) if B % d == 0]
    fitting = [d for d in divisors if d * item_bytes <= target_bytes]
    if fitting:
        return max(fitting)
    if divisors:
        return min(divisors)
    return B


def concat_pool(feats):
    """feats: (B, S, nc) channels-last encoder features (bf16/f32).
    Returns (B, 2*nc) f32 = [max, avg] over S (AdaptiveConcatPool2d order)."""
    B, S, nc = feats.shape
    item_bytes = S * nc * feats.dtype.itemsize
    TB = _pick_item_tile(B, item_bytes)
    assert B % TB == 0, (B, TB)
    # TODO(synk): for very large per-item S*nc (does not occur for this model) restore a
    # streamed-S reduction variant instead of one-shot full-S blocks.
    in_tile = TB * S * nc * feats.dtype.itemsize
    out_tile = TB * 2 * nc * 4
    f32_tmp = TB * S * nc * 4
    vmem_limit = int(min(100 * 2**20,
                         max(8 * 2**20, 2 * (in_tile + out_tile) + 2 * f32_tmp + 2 * 2**20)))
    return pl.pallas_call(
        functools.partial(_concat_pool_kernel, inv_s=1.0 / float(S)),
        out_shape=jax.ShapeDtypeStruct((B, 2 * nc), jnp.float32),
        grid=(B // TB,),
        in_specs=[pl.BlockSpec((TB, S, nc), lambda i: (i, 0, 0))],
        out_specs=pl.BlockSpec((TB, 2 * nc), lambda i: (i, 0)),
        compiler_params=pltpu.CompilerParams(
            dimension_semantics=("parallel",),
            vmem_limit_bytes=vmem_limit),
    )(feats)


# -----------------------------------------------------------------------------
# Kernel 2: 2-layer bidirectional LSTM + meta concat + final Linear.
# -----------------------------------------------------------------------------
def _sigmoid(x):
    # exp and approx reciprocal both run on the EUP slot, off the serial VALU path.
    return pl.reciprocal(1.0 + jnp.exp(-x), approx=True)


def _lstm_cell(xproj, h, c, w_hh, hidden):
    """One PyTorch-convention LSTM step (gate order i, f, g, o).
    xproj = x @ W_ih + b_ih + b_hh (already hoisted out of the recurrence), f32."""
    gates = xproj + jnp.dot(h.astype(jnp.bfloat16), w_hh,
                            preferred_element_type=jnp.float32)
    i = _sigmoid(gates[:, :hidden])
    f = _sigmoid(gates[:, hidden:2 * hidden])
    g = jnp.tanh(gates[:, 2 * hidden:3 * hidden])
    o = _sigmoid(gates[:, 3 * hidden:])
    c_new = f * c + i * g
    return o * jnp.tanh(c_new), c_new


def _bilstm_recurrence(xp, n, w_hh_f, w_hh_b, hidden):
    """xp: list of n per-timestep gate pre-activations (bs, 8*hidden); lanes [0:4h]=fwd gates,
    [4h:8h]=bwd gates.  Runs the two (independent) directions interleaved in one loop so one
    direction's MXU/EUP latency hides behind the other's work."""
    bs = xp[0].shape[0]
    zero = jnp.zeros((bs, hidden), jnp.float32)
    h_f = c_f = h_b = c_b = zero
    ys_f = [None] * n
    ys_b = [None] * n
    for t in range(n):
        u = n - 1 - t
        h_f, c_f = _lstm_cell(xp[t][:, :4 * hidden], h_f, c_f, w_hh_f, hidden)
        h_b, c_b = _lstm_cell(xp[u][:, 4 * hidden:], h_b, c_b, w_hh_b, hidden)
        ys_f[t] = h_f
        ys_b[u] = h_b
    return ys_f, ys_b


def _lstm_head_kernel(x_ref, meta_ref,
                      wih0_ref, whh0f_ref, whh0b_ref, b0_ref,
                      wih1_ref, whh1f_ref, whh1b_ref, b1_ref,
                      wfc_ref, bfc_ref, out_ref, *, hidden, n_instance):
    n = n_instance
    bs = x_ref.shape[0] // n                       # x is timestep-major: row = t*bs + b

    # --- Layer 0: input projection hoisted into ONE MXU matmul (all t, both directions). ---
    xproj0 = (jnp.dot(x_ref[...], wih0_ref[...], preferred_element_type=jnp.float32)
              + b0_ref[...])                       # (n*bs, 8*hidden)
    xp0 = [xproj0[t * bs:(t + 1) * bs, :] for t in range(n)]
    ys_f, ys_b = _bilstm_recurrence(xp0, n, whh0f_ref[...], whh0b_ref[...], hidden)

    # --- Layer 1: input projections hoisted out of the recurrence (back-to-back matmuls
    # against the small fused w_ih1, no serial dependence between them). ---
    b1 = b1_ref[...]
    xp1 = [jnp.dot(jnp.concatenate([ys_f[t], ys_b[t]], axis=-1).astype(jnp.bfloat16),
                   wih1_ref[...], preferred_element_type=jnp.float32) + b1
           for t in range(n)]
    ys_f, ys_b = _bilstm_recurrence(xp1, n, whh1f_ref[...], whh1b_ref[...], hidden)

    # --- Fused final Linear on cat([y_0 .. y_{n-1}, meta]): one lane-concat + one matmul. ---
    full = jnp.concatenate(
        [jnp.concatenate([ys_f[t], ys_b[t]], axis=-1) for t in range(n)] + [meta_ref[...]],
        axis=-1).astype(jnp.bfloat16)              # (bs, 2*hidden*n + meta_col_n*n)
    out_ref[...] = (jnp.dot(full, wfc_ref[...], preferred_element_type=jnp.float32)
                    + bfc_ref[...])


def _prep_head_params(params, dtype=jnp.bfloat16):
    """Fuse per-direction input-projection weights/biases ([fwd || bwd] along the output axis)
    and cast matmul weights to bf16 (MXU-native; halves VMEM residency). Biases stay f32."""
    def fuse(l):
        return (jnp.concatenate([l["w_ih_f"], l["w_ih_b"]], axis=1).astype(dtype),
                l["w_hh_f"].astype(dtype), l["w_hh_b"].astype(dtype),
                jnp.concatenate([l["b_f"], l["b_b"]], axis=1))
    l0, l1 = params["lstm"]
    wih0, whh0f, whh0b, b0 = fuse(l0)
    wih1, whh1f, whh1b, b1 = fuse(l1)
    return dict(wih0=wih0, whh0f=whh0f, whh0b=whh0b, b0=b0,
                wih1=wih1, whh1f=whh1f, whh1b=whh1b, b1=b1,
                wfc=params["w_fc"].astype(dtype), bfc=params["b_fc"])


def rsna_lstm_with_meta_head(feats, meta, params, *, hidden):
    """feats: (bs, n, S, nc) channels-last encoder feature maps (bf16/f32);
    meta: (bs, n, meta_col_n).  Returns logits (bs, num_classes)."""
    bs, n, S, nc = feats.shape
    num_classes = params["b_fc"].shape[-1]

    # Kernel 1: AdaptiveConcatPool2d over the flattened (bs*n) items.
    pooled = concat_pool(feats.reshape(bs * n, S, nc))              # (bs*n, 2*nc) f32

    # Timestep-major layout so the hoisted layer-0 projection sees per-timestep gate blocks
    # as contiguous row slices.  Tiny (bs*n, 2*nc) tensor -> negligible transpose.
    x_tm = (pooled.reshape(bs, n, 2 * nc).transpose(1, 0, 2)
            .reshape(n * bs, 2 * nc).astype(jnp.bfloat16))
    meta2d = meta.reshape(bs, -1).astype(jnp.float32)

    hp = _prep_head_params(params)
    inputs = [x_tm, meta2d,
              hp["wih0"], hp["whh0f"], hp["whh0b"], hp["b0"],
              hp["wih1"], hp["whh1f"], hp["whh1b"], hp["b1"],
              hp["wfc"], hp["bfc"]]
    head_bytes = sum(int(a.size) * a.dtype.itemsize for a in inputs)
    vmem_head = int(min(56 * 2**20, max(16 * 2**20, 2 * head_bytes + 4 * 2**20)))

    vmem = pl.BlockSpec(memory_space=pltpu.MemorySpace.VMEM)
    # Kernel 2: small, everything VMEM-resident (bf16 weights keep it well under v7x's 64 MiB
    # at production nc=2048).  See TODO above re: batch grid axis for large bs on v7x.
    return pl.pallas_call(
        functools.partial(_lstm_head_kernel, hidden=hidden, n_instance=n),
        out_shape=jax.ShapeDtypeStruct((bs, num_classes), jnp.float32),
        in_specs=[vmem] * len(inputs),
        out_specs=vmem,
        compiler_params=pltpu.CompilerParams(vmem_limit_bytes=vmem_head),
    )(*inputs)


# -----------------------------------------------------------------------------
# Params + pure-JAX reference.
# -----------------------------------------------------------------------------
def init_params(key, nc, hidden, n_instance, meta_col_n, num_classes):
    """Deterministic PyTorch-style init.  Weights stored (in, out) (transposed vs torch);
    LSTM gate order along the 4*hidden axis is (i, f, g, o); b_ih + b_hh folded into one bias."""
    def uniform(k, shape, bound):
        return jax.random.uniform(k, shape, jnp.float32, -bound, bound)

    k_lstm, k_fc = jax.random.split(key)
    lstm_keys = jax.random.split(k_lstm, 2)
    lstm_params = []
    in_dim = 2 * nc
    bound = 1.0 / float(hidden) ** 0.5
    for layer in range(2):
        ks = jax.random.split(lstm_keys[layer], 8)
        lstm_params.append({
            "w_ih_f": uniform(ks[0], (in_dim, 4 * hidden), bound),
            "w_hh_f": uniform(ks[1], (hidden, 4 * hidden), bound),
            "b_f": uniform(ks[2], (1, 4 * hidden), bound) + uniform(ks[3], (1, 4 * hidden), bound),
            "w_ih_b": uniform(ks[4], (in_dim, 4 * hidden), bound),
            "w_hh_b": uniform(ks[5], (hidden, 4 * hidden), bound),
            "b_b": uniform(ks[6], (1, 4 * hidden), bound) + uniform(ks[7], (1, 4 * hidden), bound),
        })
        in_dim = 2 * hidden
    fc_in = 2 * hidden * n_instance + meta_col_n * n_instance
    fc_bound = 1.0 / float(fc_in) ** 0.5
    kw, kb = jax.random.split(k_fc)
    return {
        "lstm": lstm_params,
        "w_fc": uniform(kw, (fc_in, num_classes), fc_bound),
        "b_fc": uniform(kb, (1, num_classes), fc_bound),
    }


def ref_forward(feats, meta, params, *, hidden):
    """Pure-JAX f32 reference: AdaptiveConcatPool2d + 2-layer biLSTM + meta concat + fc."""
    bs, n, S, nc = feats.shape
    x = feats.astype(jnp.float32)
    pooled = jnp.concatenate([jnp.max(x, axis=2), jnp.mean(x, axis=2)], axis=-1)

    def cell(x_t, h, c, w_ih, w_hh, b):
        g = x_t @ w_ih + h @ w_hh + b
        i, f, gg, o = jnp.split(g, 4, axis=-1)
        i, f, o = jax.nn.sigmoid(i), jax.nn.sigmoid(f), jax.nn.sigmoid(o)
        c = f * c + i * jnp.tanh(gg)
        return o * jnp.tanh(c), c

    def bilayer(xs, p):
        zero = jnp.zeros((bs, hidden), jnp.float32)
        h, c = zero, zero
        fwd = []
        for t in range(n):
            h, c = cell(xs[t], h, c, p["w_ih_f"], p["w_hh_f"], p["b_f"])
            fwd.append(h)
        h, c = zero, zero
        bwd = [None] * n
        for t in reversed(range(n)):
            h, c = cell(xs[t], h, c, p["w_ih_b"], p["w_hh_b"], p["b_b"])
            bwd[t] = h
        return [jnp.concatenate([fwd[t], bwd[t]], axis=-1) for t in range(n)]

    xs = [pooled[:, t] for t in range(n)]
    l0, l1 = params["lstm"]
    ys = bilayer(bilayer(xs, l0), l1)
    full = jnp.concatenate(ys + [meta.reshape(bs, -1).astype(jnp.float32)], axis=-1)
    return full @ params["w_fc"] + params["b_fc"]


if __name__ == "__main__":
    # Small shapes consistent with the module (real model: nc=2048, hidden=256, n_instance=5,
    # larger spatial maps; nc/spatial scaled down here, hidden kept at the module's 256).
    bs, n_instance, nc, w2, h2 = 2, 5, 128, 8, 8
    hidden, meta_col_n, num_classes = 256, 2, 2
    S = w2 * h2

    key = jax.random.PRNGKey(0)
    k_feat, k_meta, k_param = jax.random.split(key, 3)

    # TODO(synk): the SE-ResNeXt50 encoder is a full CNN and is not re-implemented; feed
    # synthetic encoder feature maps directly in channels-last (bs, n, S, nc) layout (the
    # encoder should emit channels-last so no HBM transpose sits on the measured path).
    feats = jax.random.normal(k_feat, (bs, n_instance, S, nc), jnp.float32).astype(jnp.bfloat16)
    meta = jax.random.normal(k_meta, (bs, n_instance, meta_col_n), jnp.float32)

    params = init_params(k_param, nc=nc, hidden=hidden, n_instance=n_instance,
                         meta_col_n=meta_col_n, num_classes=num_classes)

    out = jax.block_until_ready(
        rsna_lstm_with_meta_head(feats, meta, params, hidden=hidden))

    with jax.default_matmul_precision("float32"):
        ref = jax.block_until_ready(ref_forward(feats, meta, params, hidden=hidden))

    assert out.shape == (bs, num_classes), out.shape
    # Kernel uses bf16 weights/activations on the MXU (f32 accumulation) + approx-reciprocal
    # sigmoid; reference is full f32, so allow a bf16-sized tolerance.
    assert jnp.allclose(out, ref, atol=2e-2, rtol=2e-2), (out, ref)
    print("KERNEL_OK")
</pallas_src>

<mosaic_0001>
module attributes {stable_mosaic.version = 11 : i64} {
  func.func @_concat_pool_kernel(%arg0: i32, %arg1: memref<10x64x128xbf16, #tpu.memory_space<vmem>>, %arg2: memref<10x256xf32, #tpu.memory_space<vmem>>) attributes {dimension_semantics = [#tpu.dimension_semantics<parallel>], iteration_bounds = array<i64: 1>, scalar_prefetch = 0 : i64, scratch_operands = 0 : i64, tpu.core_type = #tpu.core_type<tc>, window_params = [{transform_indices = @transform_0, window_bounds = array<i64: 10, 64, 128>}, {transform_indices = @transform_1, window_bounds = array<i64: 10, 256>}]} {
    %c0 = arith.constant 0 : index
    %c0_0 = arith.constant 0 : index
    %c0_1 = arith.constant 0 : index
    %0 = vector.load %arg1[%c0, %c0_0, %c0_1] : memref<10x64x128xbf16, #tpu.memory_space<vmem>>, vector<10x64x128xbf16>
    %1 = arith.extf %0 : vector<10x64x128xbf16> to vector<10x64x128xf32>
    %cst = arith.constant dense<0xFF800000> : vector<10x128xf32>
    %2 = vector.multi_reduction <maximumf>, %1, %cst [1] : vector<10x64x128xf32> to vector<10x128xf32>
    %c0_2 = arith.constant 0 : index
    %c0_3 = arith.constant 0 : index
    %3 = vector.load %arg2[%c0_2, %c0_3] : memref<10x256xf32, #tpu.memory_space<vmem>>, vector<10x128xf32>
    tpu.vector_store %arg2[%c0_2, %c0_3], %2 {strides = array<i32>} : memref<10x256xf32, #tpu.memory_space<vmem>>, vector<10x128xf32>,
    %cst_4 = arith.constant dense<0.000000e+00> : vector<10x128xf32>
    %4 = vector.multi_reduction <add>, %1, %cst_4 [1] : vector<10x64x128xf32> to vector<10x128xf32>
    %cst_5 = arith.constant 1.562500e-02 : f32
    %5 = vector.broadcast %cst_5 : f32 to vector<10x128xf32>
    %6 = arith.mulf %4, %5 : vector<10x128xf32>
    %c0_6 = arith.constant 0 : index
    %c128 = arith.constant 128 : index
    %7 = vector.load %arg2[%c0_6, %c128] : memref<10x256xf32, #tpu.memory_space<vmem>>, vector<10x128xf32>
    tpu.vector_store %arg2[%c0_6, %c128], %6 {strides = array<i32>} : memref<10x256xf32, #tpu.memory_space<vmem>>, vector<10x128xf32>,
    return
  }
  func.func @transform_0(%arg0: i32) -> (i32, i32, i32) {
    %c0_i32 = arith.constant 0 : i32
    %c0_i32_0 = arith.constant 0 : i32
    %c0_i32_1 = arith.constant 0 : i32
    return %arg0, %c0_i32, %c0_i32_0 : i32, i32, i32
  }
  func.func @transform_1(%arg0: i32) -> (i32, i32) {
    %c0_i32 = arith.constant 0 : i32
    %c0_i32_0 = arith.constant 0 : i32
    return %arg0, %c0_i32 : i32, i32
  }
}

</mosaic_0001>

<llo_original>
// kernel: tpu_custom_call.1
$region0: #{tpu_custom_call.1}
  #allocation0 [shape = 'u32[]', space=smem, size = 0x4, offset = 0x4, fixed_abs, tag = 'smem constant byte address 0x4 - core index']
  #allocation1 [shape = 'u32[144,128]{1,0:T(1,128)}', space=vmem, size = 0x12000, scoped, tag = 'internal scratch']
  %s0 = inlined_call_operand.hbm [shape: bf16[10,64,128], index: 0, kind: input, shape index: {}]
  %s1 = inlined_call_operand.hbm [shape: f32[10,256], index: 1, kind: output, shape index: {}]
  %s2 = sld [smem:[#allocation0]]
  $region18: #{tpu_custom_call.1} parent=0
    _
  %s4 = ssub.s32 1, %s2
  %s5 = scalar_select 0, %s4, %s2
  $region1: #{tpu_custom_call.1} parent=0
    #allocation2 [shape = 'u8[163840]{0}', space=vmem, size = 0x28000, scoped, tag = 'input window, operand 0, single buffered']
    #allocation3 [shape = 's32[1]{0}', space=sflag, size = 0x4, scoped, tag = 'scoped memory for tpu_custom_call.1']
    #allocation4 [shape = 's32[1]{0}', space=sflag, size = 0x4, scoped, tag = 'scoped memory for tpu_custom_call.1']
    #allocation5 [shape = 'u8[16384]{0}', space=vmem, size = 0x4000, scoped, tag = 'output window, operand 0, single buffered']
    %6 = vsyncpa [#allocation3], 0
    %7 = vsyncpa [#allocation4], 0
    // Predicated region
    $region2: #{tpu_custom_call.1} parent=1 // pred_check
      _
    $region3: #{tpu_custom_call.1} parent=1 // pred_check_branch
      %9 = sbr.rel (0) target = $region5
    $region4: #{tpu_custom_call.1} parent=1 // pred_region
      %s11 = ssub.s32 5120, 5120
      %12 = vsyncadd [#allocation3], %s11
      %s13 = sshll.u32 [#allocation2], 4
      %s14 = int_to_ptr.vmem [resolvable:$true] %s13
      %19 = dma.hbm_to_vmem [thread:$0]  %s0, 5120, %s14, [#allocation3], 64, 64, 4
    $region5: #{tpu_custom_call.1} parent=1 // pred_fallthru
      _
    // Predicated region
    $region6: #{tpu_custom_call.1} parent=1 // pred_check
      _
    $region7: #{tpu_custom_call.1} parent=1 // pred_check_branch
      %21 = sbr.rel (0) target = $region9
    $region8: #{tpu_custom_call.1} parent=1 // pred_region
      %22 = dma.done [#allocation3], 5120
    $region9: #{tpu_custom_call.1} parent=1 // pred_fallthru
      _
    %v23 = vld [vmem:[#allocation2] sm:$0xf]
    %v24 = vld [vmem:[#allocation2 + $0x4] sm:$0xf]
    %v25 = vld [vmem:[#allocation2 + $0x8] sm:$0xf]
    %v26 = vld [vmem:[#allocation2 + $0xc] sm:$0xf]
    %v27 = vld [vmem:[#allocation2 + $0x10] sm:$0xf]
    %v28 = vld [vmem:[#allocation2 + $0x14] sm:$0xf]
    %v29 = vld [vmem:[#allocation2 + $0x18] sm:$0xf]
    %v30 = vld [vmem:[#allocation2 + $0x1c] sm:$0xf]
    %v31 = vld [vmem:[#allocation2 + $0x20] sm:$0xf]
    %v32 = vld [vmem:[#allocation2 + $0x24] sm:$0xf]
    %v33 = vld [vmem:[#allocation2 + $0x28] sm:$0xf]
    %v34 = vld [vmem:[#allocation2 + $0x2c] sm:$0xf]
    %v35 = vld [vmem:[#allocation2 + $0x30] sm:$0xf]
    %v36 = vld [vmem:[#allocation2 + $0x34] sm:$0xf]
    %v37 = vld [vmem:[#allocation2 + $0x38] sm:$0xf]
    %v38 = vld [vmem:[#allocation2 + $0x3c] sm:$0xf]
    %v39 = vld [vmem:[#allocation2 + $0x40] sm:$0xf]
    %v40 = vld [vmem:[#allocation2 + $0x44] sm:$0xf]
    %v41 = vld [vmem:[#allocation2 + $0x48] sm:$0xf]
    %v42 = vld [vmem:[#allocation2 + $0x4c] sm:$0xf]
    %v43 = vld [vmem:[#allocation2 + $0x50] sm:$0xf]
    %v44 = vld [vmem:[#allocation2 + $0x54] sm:$0xf]
    %v45 = vld [vmem:[#allocation2 + $0x58] sm:$0xf]
    %v46 = vld [vmem:[#allocation2 + $0x5c] sm:$0xf]
    %v47 = vld [vmem:[#allocation2 + $0x60] sm:$0xf]
    %v48 = vld [vmem:[#allocation2 + $0x64] sm:$0xf]
    %v49 = vld [vmem:[#allocation2 + $0x68] sm:$0xf]
    %v50 = vld [vmem:[#allocation2 + $0x6c] sm:$0xf]
    %v51 = vld [vmem:[#allocation2 + $0x70] sm:$0xf]
    %v52 = vld [vmem:[#allocation2 + $0x74] sm:$0xf]
    %v53 = vld [vmem:[#allocation2 + $0x78] sm:$0xf]
    %v54 = vld [vmem:[#allocation2 + $0x7c] sm:$0xf]
    %v55 = vld [vmem:[#allocation2 + $0x80] sm:$0xf]
    %v56 = vld [vmem:[#allocation2 + $0x84] sm:$0xf]
    %v57 = vld [vmem:[#allocation2 + $0x88] sm:$0xf]
    %v58 = vld [vmem:[#allocation2 + $0x8c] sm:$0xf]
    %v59 = vld [vmem:[#allocation2 + $0x90] sm:$0xf]
    %v60 = vld [vmem:[#allocation2 + $0x94] sm:$0xf]
    %v61 = vld [vmem:[#allocation2 + $0x98] sm:$0xf]
    %v62 = vld [vmem:[#allocation2 + $0x9c] sm:$0xf]
    %v63 = vld [vmem:[#allocation2 + $0xa0] sm:$0xf]
    %v64 = vld [vmem:[#allocation2 + $0xa4] sm:$0xf]
    %v65 = vld [vmem:[#allocation2 + $0xa8] sm:$0xf]
    %v66 = vld [vmem:[#allocation2 + $0xac] sm:$0xf]
    %v67 = vld [vmem:[#allocation2 + $0xb0] sm:$0xf]
    %v68 = vld [vmem:[#allocation2 + $0xb4] sm:$0xf]
    %v69 = vld [vmem:[#allocation2 + $0xb8] sm:$0xf]
    %v70 = vld [vmem:[#allocation2 + $0xbc] sm:$0xf]
    %v71 = vld [vmem:[#allocation2 + $0xc0] sm:$0xf]
    %v72 = vld [vmem:[#allocation2 + $0xc4] sm:$0xf]
    %v73 = vld [vmem:[#allocation2 + $0xc8] sm:$0xf]
    %v74 = vld [vmem:[#allocation2 + $0xcc] sm:$0xf]
    %v75 = vld [vmem:[#allocation2 + $0xd0] sm:$0xf]
    %v76 = vld [vmem:[#allocation2 + $0xd4] sm:$0xf]
    %v77 = vld [vmem:[#allocation2 + $0xd8] sm:$0xf]
    %v78 = vld [vmem:[#allocation2 + $0xdc] sm:$0xf]
    %v79 = vld [vmem:[#allocation2 + $0xe0] sm:$0xf]
    %v80 = vld [vmem:[#allocation2 + $0xe4] sm:$0xf]
    %v81 = vld [vmem:[#allocation2 + $0xe8] sm:$0xf]
    %v82 = vld [vmem:[#allocation2 + $0xec] sm:$0xf]
    %v83 = vld [vmem:[#allocation2 + $0xf0] sm:$0xf]
    %v84 = vld [vmem:[#allocation2 + $0xf4] sm:$0xf]
    %v85 = vld [vmem:[#allocation2 + $0xf8] sm:$0xf]
    %v86 = vld [vmem:[#allocation2 + $0xfc] sm:$0xf]
    %v87 = vld [vmem:[#allocation2 + $0x100] sm:$0xf]
    %v88 = vld [vmem:[#allocation2 + $0x104] sm:$0xf]
    %v89 = vld [vmem:[#allocation2 + $0x108] sm:$0xf]
    %v90 = vld [vmem:[#allocation2 + $0x10c] sm:$0xf]
    %v91 = vld [vmem:[#allocation2 + $0x110] sm:$0xf]
    %v92 = vld [vmem:[#allocation2 + $0x114] sm:$0xf]
    %v93 = vld [vmem:[#allocation2 + $0x118] sm:$0xf]
    %v94 = vld [vmem:[#allocation2 + $0x11c] sm:$0xf]
    %v95 = vld [vmem:[#allocation2 + $0x120] sm:$0xf]
    %v96 = vld [vmem:[#allocation2 + $0x124] sm:$0xf]
    %v97 = vld [vmem:[#allocation2 + $0x128] sm:$0xf]
    %v98 = vld [vmem:[#allocation2 + $0x12c] sm:$0xf]
    %v99 = vld [vmem:[#allocation2 + $0x130] sm:$0xf]
    %v100 = vld [vmem:[#allocation2 + $0x134] sm:$0xf]
    %v101 = vld [vmem:[#allocation2 + $0x138] sm:$0xf]
    %v102 = vld [vmem:[#allocation2 + $0x13c] sm:$0xf]
    %v103 = vunpack.c.l.bf16 %v23
    %v104 = vunpack.c.l.bf16 %v24
    %v105 = vunpack.c.l.bf16 %v25
    %v106 = vunpack.c.l.bf16 %v26
    %v107 = vunpack.c.l.bf16 %v27
    %v108 = vunpack.c.l.bf16 %v28
    %v109 = vunpack.c.l.bf16 %v29
    %v110 = vunpack.c.l.bf16 %v30
    %v111 = vunpack.c.l.bf16 %v31
    %v112 = vunpack.c.l.bf16 %v32
    %v113 = vunpack.c.l.bf16 %v33
    %v114 = vunpack.c.l.bf16 %v34
    %v115 = vunpack.c.l.bf16 %v35
    %v116 = vunpack.c.l.bf16 %v36
    %v117 = vunpack.c.l.bf16 %v37
    %v118 = vunpack.c.l.bf16 %v38
    %v119 = vunpack.c.l.bf16 %v39
    %v120 = vunpack.c.l.bf16 %v40
    %v121 = vunpack.c.l.bf16 %v41
    %v122 = vunpack.c.l.bf16 %v42
    %v123 = vunpack.c.l.bf16 %v43
    %v124 = vunpack.c.l.bf16 %v44
    %v125 = vunpack.c.l.bf16 %v45
    %v126 = vunpack.c.l.bf16 %v46
    %v127 = vunpack.c.l.bf16 %v47
    %v128 = vunpack.c.l.bf16 %v48
    %v129 = vunpack.c.l.bf16 %v49
    %v130 = vunpack.c.l.bf16 %v50
    %v131 = vunpack.c.l.bf16 %v51
    %v132 = vunpack.c.l.bf16 %v52
    %v133 = vunpack.c.l.bf16 %v53
    %v134 = vunpack.c.l.bf16 %v54
    %v135 = vunpack.c.l.bf16 %v55
    %v136 = vunpack.c.l.bf16 %v56
    %v137 = vunpack.c.l.bf16 %v57
    %v138 = vunpack.c.l.bf16 %v58
    %v139 = vunpack.c.l.bf16 %v59
    %v140 = vunpack.c.l.bf16 %v60
    %v141 = vunpack.c.l.bf16 %v61
    %v142 = vunpack.c.l.bf16 %v62
    %v143 = vunpack.c.l.bf16 %v63
    %v144 = vunpack.c.l.bf16 %v64
    %v145 = vunpack.c.l.bf16 %v65
    %v146 = vunpack.c.l.bf16 %v66
    %v147 = vunpack.c.l.bf16 %v67
    %v148 = vunpack.c.l.bf16 %v68
    %v149 = vunpack.c.l.bf16 %v69
    %v150 = vunpack.c.l.bf16 %v70
    %v151 = vunpack.c.l.bf16 %v71
    %v152 = vunpack.c.l.bf16 %v72
    %v153 = vunpack.c.l.bf16 %v73
    %v154 = vunpack.c.l.bf16 %v74
    %v155 = vunpack.c.l.bf16 %v75
    %v156 = vunpack.c.l.bf16 %v76
    %v157 = vunpack.c.l.bf16 %v77
    %v158 = vunpack.c.l.bf16 %v78
    %v159 = vunpack.c.l.bf16 %v79
    %v160 = vunpack.c.l.bf16 %v80
    %v161 = vunpack.c.l.bf16 %v81
    %v162 = vunpack.c.l.bf16 %v82
    %v163 = vunpack.c.l.bf16 %v83
    %v164 = vunpack.c.l.bf16 %v84
    %v165 = vunpack.c.l.bf16 %v85
    %v166 = vunpack.c.l.bf16 %v86
    %v167 = vunpack.c.l.bf16 %v87
    %v168 = vunpack.c.l.bf16 %v88
    %v169 = vunpack.c.l.bf16 %v89
    %v170 = vunpack.c.l.bf16 %v90
    %v171 = vunpack.c.l.bf16 %v91
    %v172 = vunpack.c.l.bf16 %v92
    %v173 = vunpack.c.l.bf16 %v93
    %v174 = vunpack.c.l.bf16 %v94
    %v175 = vunpack.c.l.bf16 %v95
    %v176 = vunpack.c.l.bf16 %v96
    %v177 = vunpack.c.l.bf16 %v97
    %v178 = vunpack.c.l.bf16 %v98
    %v179 = vunpack.c.l.bf16 %v99
    %v180 = vunpack.c.l.bf16 %v100
    %v181 = vunpack.c.l.bf16 %v101
    %v182 = vunpack.c.l.bf16 %v102
    %v183 = vmax.f32 %v103, %v104
    %v184 = vmax.f32 %v183, %v105
    %v185 = vmax.f32 %v184, %v106
    %v186 = vmax.f32 %v185, %v107
    %v187 = vmax.f32 %v186, %v108
    %v188 = vmax.f32 %v187, %v109
    %v189 = vmax.f32 %v188, %v110
    %v190 = vrot.slane %v189, 4
    %v191 = vmax.f32 %v189, %v190
    %v192 = vrot.slane %v191, 2
    %v193 = vmax.f32 %v191, %v192
    %v194 = vrot.slane %v193, 1
    %v195 = vmax.f32 %v193, %v194
    %v196 = vmax.f32 %v111, %v112
    %v197 = vmax.f32 %v196, %v113
    %v198 = vmax.f32 %v197, %v114
    %v199 = vmax.f32 %v198, %v115
    %v200 = vmax.f32 %v199, %v116
    %v201 = vmax.f32 %v200, %v117
    %v202 = vmax.f32 %v201, %v118
    %v203 = vrot.slane %v202, 4
    %v204 = vmax.f32 %v202, %v203
    %v205 = vrot.slane %v204, 2
    %v206 = vmax.f32 %v204, %v205
    %v207 = vrot.slane %v206, 1
    %v208 = vmax.f32 %v206, %v207
    %v209 = vmax.f32 %v119, %v120
    %v210 = vmax.f32 %v209, %v121
    %v211 = vmax.f32 %v210, %v122
    %v212 = vmax.f32 %v211, %v123
    %v213 = vmax.f32 %v212, %v124
    %v214 = vmax.f32 %v213, %v125
    %v215 = vmax.f32 %v214, %v126
    %v216 = vrot.slane %v215, 4
    %v217 = vmax.f32 %v215, %v216
    %v218 = vrot.slane %v217, 2
    %v219 = vmax.f32 %v217, %v218
    %v220 = vrot.slane %v219, 1
    %v221 = vmax.f32 %v219, %v220
    %v222 = vmax.f32 %v127, %v128
    %v223 = vmax.f32 %v222, %v129
    %v224 = vmax.f32 %v223, %v130
    %v225 = vmax.f32 %v224, %v131
    %v226 = vmax.f32 %v225, %v132
    %v227 = vmax.f32 %v226, %v133
    %v228 = vmax.f32 %v227, %v134
    %v229 = vrot.slane %v228, 4
    %v230 = vmax.f32 %v228, %v229
    %v231 = vrot.slane %v230, 2
    %v232 = vmax.f32 %v230, %v231
    %v233 = vrot.slane %v232, 1
    %v234 = vmax.f32 %v232, %v233
    %v235 = vmax.f32 %v135, %v136
    %v236 = vmax.f32 %v235, %v137
    %v237 = vmax.f32 %v236, %v138
    %v238 = vmax.f32 %v237, %v139
    %v239 = vmax.f32 %v238, %v140
    %v240 = vmax.f32 %v239, %v141
    %v241 = vmax.f32 %v240, %v142
    %v242 = vrot.slane %v241, 4
    %v243 = vmax.f32 %v241, %v242
    %v244 = vrot.slane %v243, 2
    %v245 = vmax.f32 %v243, %v244
    %v246 = vrot.slane %v245, 1
    %v247 = vmax.f32 %v245, %v246
    %v248 = vmax.f32 %v143, %v144
    %v249 = vmax.f32 %v248, %v145
    %v250 = vmax.f32 %v249, %v146
    %v251 = vmax.f32 %v250, %v147
    %v252 = vmax.f32 %v251, %v148
    %v253 = vmax.f32 %v252, %v149
    %v254 = vmax.f32 %v253, %v150
    %v255 = vrot.slane %v254, 4
    %v256 = vmax.f32 %v254, %v255
    %v257 = vrot.slane %v256, 2
    %v258 = vmax.f32 %v256, %v257
    %v259 = vrot.slane %v258, 1
    %v260 = vmax.f32 %v258, %v259
    %v261 = vmax.f32 %v151, %v152
    %v262 = vmax.f32 %v261, %v153
    %v263 = vmax.f32 %v262, %v154
    %v264 = vmax.f32 %v263, %v155
    %v265 = vmax.f32 %v264, %v156
    %v266 = vmax.f32 %v265, %v157
    %v267 = vmax.f32 %v266, %v158
    %v268 = vrot.slane %v267, 4
    %v269 = vmax.f32 %v267, %v268
    %v270 = vrot.slane %v269, 2
    %v271 = vmax.f32 %v269, %v270
    %v272 = vrot.slane %v271, 1
    %v273 = vmax.f32 %v271, %v272
    %v274 = vmax.f32 %v159, %v160
    %v275 = vmax.f32 %v274, %v161
    %v276 = vmax.f32 %v275, %v162
    %v277 = vmax.f32 %v276, %v163
    %v278 = vmax.f32 %v277, %v164
    %v279 = vmax.f32 %v278, %v165
    %v280 = vmax.f32 %v279, %v166
    %v281 = vrot.slane %v280, 4
    %v282 = vmax.f32 %v280, %v281
    %v283 = vrot.slane %v282, 2
    %v284 = vmax.f32 %v282, %v283
    %v285 = vrot.slane %v284, 1
    %v286 = vmax.f32 %v284, %v285
    %v287 = vmax.f32 %v167, %v168
    %v288 = vmax.f32 %v287, %v169
    %v289 = vmax.f32 %v288, %v170
    %v290 = vmax.f32 %v289, %v171
    %v291 = vmax.f32 %v290, %v172
    %v292 = vmax.f32 %v291, %v173
    %v293 = vmax.f32 %v292, %v174
    %v294 = vrot.slane %v293, 4
    %v295 = vmax.f32 %v293, %v294
    %v296 = vrot.slane %v295, 2
    %v297 = vmax.f32 %v295, %v296
    %v298 = vrot.slane %v297, 1
    %v299 = vmax.f32 %v297, %v298
    %v300 = vmax.f32 %v175, %v176
    %v301 = vmax.f32 %v300, %v177
    %v302 = vmax.f32 %v301, %v178
    %v303 = vmax.f32 %v302, %v179
    %v304 = vmax.f32 %v303, %v180
    %v305 = vmax.f32 %v304, %v181
    %v306 = vmax.f32 %v305, %v182
    %v307 = vrot.slane %v306, 4
    %v308 = vmax.f32 %v306, %v307
    %v309 = vrot.slane %v308, 2
    %v310 = vmax.f32 %v308, %v309
    %v311 = vrot.slane %v310, 1
    %v312 = vmax.f32 %v310, %v311
    %vm323 = vcmask 1041409
    %v324 = vsel %vm323, %v208, %v195
    %vm325 = vcmask 1042434
    %v326 = vsel %vm325, %v221, %v324
    %vm327 = vcmask 1043459
    %v328 = vsel %vm327, %v234, %v326
    %vm329 = vcmask 1044484
    %v330 = vsel %vm329, %v247, %v328
    %vm331 = vcmask 1045509
    %v332 = vsel %vm331, %v260, %v330
    %vm333 = vcmask 1046534
    %v334 = vsel %vm333, %v273, %v332
    %vm335 = vcmask 1047559
    %v336 = vsel %vm335, %v286, %v334
    %v337 = vsel %vm323, %v312, %v299
    %340 = vst [vmem:[#allocation5] sm:$0xff] %v336
    %341 = vst [vmem:[#allocation5 + $0x10] sm:$0x3] %v337
    %v342 = vadd.f32 %v103, %v104
    %v343 = vadd.f32 %v342, %v105
    %v344 = vadd.f32 %v343, %v106
    %v345 = vadd.f32 %v344, %v107
    %v346 = vadd.f32 %v345, %v108
    %v347 = vadd.f32 %v346, %v109
    %v348 = vadd.f32 %v347, %v110
    %v349 = vrot.slane %v348, 4
    %v350 = vadd.f32 %v348, %v349
    %v351 = vrot.slane %v350, 2
    %v352 = vadd.f32 %v350, %v351
    %v353 = vrot.slane %v352, 1
    %v354 = vadd.f32 %v352, %v353
    %v355 = vadd.f32 %v111, %v112
    %v356 = vadd.f32 %v355, %v113
    %v357 = vadd.f32 %v356, %v114
    %v358 = vadd.f32 %v357, %v115
    %v359 = vadd.f32 %v358, %v116
    %v360 = vadd.f32 %v359, %v117
    %v361 = vadd.f32 %v360, %v118
    %v362 = vrot.slane %v361, 4
    %v363 = vadd.f32 %v361, %v362
    %v364 = vrot.slane %v363, 2
    %v365 = vadd.f32 %v363, %v364
    %v366 = vrot.slane %v365, 1
    %v367 = vadd.f32 %v365, %v366
    %v368 = vadd.f32 %v119, %v120
    %v369 = vadd.f32 %v368, %v121
    %v370 = vadd.f32 %v369, %v122
    %v371 = vadd.f32 %v370, %v123
    %v372 = vadd.f32 %v371, %v124
    %v373 = vadd.f32 %v372, %v125
    %v374 = vadd.f32 %v373, %v126
    %v375 = vrot.slane %v374, 4
    %v376 = vadd.f32 %v374, %v375
    %v377 = vrot.slane %v376, 2
    %v378 = vadd.f32 %v376, %v377
    %v379 = vrot.slane %v378, 1
    %v380 = vadd.f32 %v378, %v379
    %v381 = vadd.f32 %v127, %v128
    %v382 = vadd.f32 %v381, %v129
    %v383 = vadd.f32 %v382, %v130
    %v384 = vadd.f32 %v383, %v131
    %v385 = vadd.f32 %v384, %v132
    %v386 = vadd.f32 %v385, %v133
    %v387 = vadd.f32 %v386, %v134
    %v388 = vrot.slane %v387, 4
    %v389 = vadd.f32 %v387, %v388
    %v390 = vrot.slane %v389, 2
    %v391 = vadd.f32 %v389, %v390
    %v392 = vrot.slane %v391, 1
    %v393 = vadd.f32 %v391, %v392
    %v394 = vadd.f32 %v135, %v136
    %v395 = vadd.f32 %v394, %v137
    %v396 = vadd.f32 %v395, %v138
    %v397 = vadd.f32 %v396, %v139
    %v398 = vadd.f32 %v397, %v140
    %v399 = vadd.f32 %v398, %v141
    %v400 = vadd.f32 %v399, %v142
    %v401 = vrot.slane %v400, 4
    %v402 = vadd.f32 %v400, %v401
    %v403 = vrot.slane %v402, 2
    %v404 = vadd.f32 %v402, %v403
    %v405 = vrot.slane %v404, 1
    %v406 = vadd.f32 %v404, %v405
    %v407 = vadd.f32 %v143, %v144
    %v408 = vadd.f32 %v407, %v145
    %v409 = vadd.f32 %v408, %v146
    %v410 = vadd.f32 %v409, %v147
    %v411 = vadd.f32 %v410, %v148
    %v412 = vadd.f32 %v411, %v149
    %v413 = vadd.f32 %v412, %v150
    %v414 = vrot.slane %v413, 4
    %v415 = vadd.f32 %v413, %v414
    %v416 = vrot.slane %v415, 2
    %v417 = vadd.f32 %v415, %v416
    %v418 = vrot.slane %v417, 1
    %v419 = vadd.f32 %v417, %v418
    %v420 = vadd.f32 %v151, %v152
    %v421 = vadd.f32 %v420, %v153
    %v422 = vadd.f32 %v421, %v154
    %v423 = vadd.f32 %v422, %v155
    %v424 = vadd.f32 %v423, %v156
    %v425 = vadd.f32 %v424, %v157
    %v426 = vadd.f32 %v425, %v158
    %v427 = vrot.slane %v426, 4
    %v428 = vadd.f32 %v426, %v427
    %v429 = vrot.slane %v428, 2
    %v430 = vadd.f32 %v428, %v429
    %v431 = vrot.slane %v430, 1
    %v432 = vadd.f32 %v430, %v431
    %v433 = vadd.f32 %v159, %v160
    %v434 = vadd.f32 %v433, %v161
    %v435 = vadd.f32 %v434, %v162
    %v436 = vadd.f32 %v435, %v163
    %v437 = vadd.f32 %v436, %v164
    %v438 = vadd.f32 %v437, %v165
    %v439 = vadd.f32 %v438, %v166
    %v440 = vrot.slane %v439, 4
    %v441 = vadd.f32 %v439, %v440
    %v442 = vrot.slane %v441, 2
    %v443 = vadd.f32 %v441, %v442
    %v444 = vrot.slane %v443, 1
    %v445 = vadd.f32 %v443, %v444
    %v446 = vadd.f32 %v167, %v168
    %v447 = vadd.f32 %v446, %v169
    %v448 = vadd.f32 %v447, %v170
    %v449 = vadd.f32 %v448, %v171
    %v450 = vadd.f32 %v449, %v172
    %v451 = vadd.f32 %v450, %v173
    %v452 = vadd.f32 %v451, %v174
    %v453 = vrot.slane %v452, 4
    %v454 = vadd.f32 %v452, %v453
    %v455 = vrot.slane %v454, 2
    %v456 = vadd.f32 %v454, %v455
    %v457 = vrot.slane %v456, 1
    %v458 = vadd.f32 %v456, %v457
    %v459 = vadd.f32 %v175, %v176
    %v460 = vadd.f32 %v459, %v177
    %v461 = vadd.f32 %v460, %v178
    %v462 = vadd.f32 %v461, %v179
    %v463 = vadd.f32 %v462, %v180
    %v464 = vadd.f32 %v463, %v181
    %v465 = vadd.f32 %v464, %v182
    %v466 = vrot.slane %v465, 4
    %v467 = vadd.f32 %v465, %v466
    %v468 = vrot.slane %v467, 2
    %v469 = vadd.f32 %v467, %v468
    %v470 = vrot.slane %v469, 1
    %v471 = vadd.f32 %v469, %v470
    %v472 = vmul.f32 %v354, 0.015625
    %v473 = vmul.f32 %v367, 0.015625
    %v474 = vmul.f32 %v380, 0.015625
    %v475 = vmul.f32 %v393, 0.015625
    %v476 = vmul.f32 %v406, 0.015625
    %v477 = vmul.f32 %v419, 0.015625
    %v478 = vmul.f32 %v432, 0.015625
    %v479 = vmul.f32 %v445, 0.015625
    %v480 = vmul.f32 %v458, 0.015625
    %v481 = vmul.f32 %v471, 0.015625
    %v492 = vsel %vm323, %v473, %v472
    %v493 = vsel %vm325, %v474, %v492
    %v494 = vsel %vm327, %v475, %v493
    %v495 = vsel %vm329, %v476, %v494
    %v496 = vsel %vm331, %v477, %v495
    %v497 = vsel %vm333, %v478, %v496
    %v498 = vsel %vm335, %v479, %v497
    %v499 = vsel %vm323, %v481, %v480
    %502 = vst [vmem:[#allocation5 + $0x8] sm:$0xff] %v498
    %503 = vst [vmem:[#allocation5 + $0x18] sm:$0x3] %v499
    // Predicated region
    $region10: #{tpu_custom_call.1} parent=1 // pred_check
      _
    $region11: #{tpu_custom_call.1} parent=1 // pred_check_branch
      %505 = sbr.rel (0) target = $region13
    $region12: #{tpu_custom_call.1} parent=1 // pred_region
      %s507 = ssub.s32 512, 512
      %508 = vsyncadd [#allocation4], %s507
      %s509 = sshll.u32 [#allocation5], 4
      %s510 = int_to_ptr.vmem [resolvable:$true] %s509
      %515 = dma.vmem_to_hbm [thread:$0]  %s510, 512, %s1, [#allocation4], 256, 256, 16
    $region13: #{tpu_custom_call.1} parent=1 // pred_fallthru
      _
    // Predicated region
    $region14: #{tpu_custom_call.1} parent=1 // pred_check
      _
    $region15: #{tpu_custom_call.1} parent=1 // pred_check_branch
      %517 = sbr.rel (0) target = $region17
    $region16: #{tpu_custom_call.1} parent=1 // pred_region
      %518 = dma.done [#allocation4], 512
    $region17: #{tpu_custom_call.1} parent=1 // pred_fallthru
      _
    %519 = vsyncpa [#allocation3], 1
    %520 = vsyncpa [#allocation4], 1

</llo_original>
